<compile_context>
chip_gen: v7x
topology: tpu7x:2x2x1
jax: 0.10.0
libtpu: 0.0.40
codegen_flags: <defaults>
</compile_context>

<pallas_src>
import math
import functools

import jax
import jax.numpy as jnp
from jax import lax
from jax.experimental import pallas as pl
from jax.experimental.pallas import tpu as pltpu


_LANE = 128


# ---------------------------------------------------------------------------
# Per-generation VMEM budget and queue-tile selection
# ---------------------------------------------------------------------------

def _vmem_capacity_bytes():
    """Physical VMEM per core, with a per-generation device-kind fallback."""
    try:
        return int(pltpu.get_tpu_info().vmem_capacity_bytes)
    except Exception:
        pass
    try:
        kind = jax.devices()[0].device_kind.lower()
    except Exception:
        kind = ""
    if "v7" in kind:
        return 64 << 20                       # v7x: 64 MiB per TensorCore
    if any(t in kind for t in ("v4", "v5", "v6")):
        return 128 << 20                      # v4 / v5e / v6e: 128 MiB
    return 64 << 20                           # unknown part: stay conservative


def _choose_tk(K, C, B, mem_itemsize, out_itemsize):
    """Largest queue tile (multiple of 128 that divides K) fitting the budget.

    Keeps >= 2 (up to 8) grid steps so the BlockSpec pipeline and (on
    multi-TC parts) core-parallel sharding have work to split.
    """
    cap = _vmem_capacity_bytes()
    budget = (3 * cap) // 8                   # data budget; rest = compiler slack
    sub = 8 * max(1, 4 // mem_itemsize)       # sublane granule for the queue dtype
    c_pad = pl.cdiv(C, sub) * sub
    b_pad = pl.cdiv(B, 8) * 8
    # resident q block + (C, 128) edge block (both double-buffered) + misc slack
    fixed = 2 * b_pad * max(C, _LANE) * 4 + 2 * c_pad * _LANE * mem_itemsize + (2 << 20)
    # per tk column: streamed queue block (x2 buffers) + two output blocks (x2 buffers)
    per_tk = 2 * c_pad * mem_itemsize + 4 * b_pad * out_itemsize
    tk_budget = max(_LANE, (budget - fixed) // per_tk)
    min_steps = min(8, max(2, K // _LANE))
    divisors = [d for d in range(_LANE, K + 1, _LANE) if K % d == 0]
    if not divisors:
        return K
    good = [d for d in divisors if d <= tk_budget and K // d >= min_steps]
    if good:
        return max(good)
    ok = [d for d in divisors if d <= tk_budget]
    return max(ok) if ok else divisors[0]


# ---------------------------------------------------------------------------
# Pallas kernel: fused queue logits + prefix columns, written straight into
# out1 = [l_pos, l_neg_1, neg2]/T (B, 2+K) and out2 = [l_pos_2, neg2]/T (B, 1+K)
# ---------------------------------------------------------------------------

def _moco_logits_kernel(pref1_ref, pref2_ref, q_ref, mem_ref, edge_ref,
                        out1_ref, out2_ref, *, inv_T):
    m = pl.program_id(0)
    q = q_ref[...]                                            # (B, C) bf16
    dims = (((1,), (0,)), ((), ()))
    # Queue logits for this tile: (B, tk), f32 accumulation on the MXU.
    body = lax.dot_general(q, mem_ref[...], dimension_numbers=dims,
                           preferred_element_type=jnp.float32) * inv_T
    # Logits of the last 128 queue columns of the *previous* tile; the last
    # 2 / 1 of them are the columns this output block wraps around.
    edge = lax.dot_general(q, edge_ref[...], dimension_numbers=dims,
                           preferred_element_type=jnp.float32) * inv_T

    # out1 block m column c (c >= 2) = neg2 column m*tk + c - 2  -> roll by 2.
    # out2 block m column c (c >= 1) = neg2 column m*tk + c - 1  -> roll by 1.
    out1_ref[...] = pltpu.roll(body, shift=2, axis=1).astype(out1_ref.dtype)
    out2_ref[...] = pltpu.roll(body, shift=1, axis=1).astype(out2_ref.dtype)
    # Patch the wrapped-around lanes with the true values (previous tile's
    # trailing logits), then with the prefix columns on the first block.
    out1_ref[:, 0:2] = edge[:, -2:].astype(out1_ref.dtype)
    out2_ref[:, 0:1] = edge[:, -1:].astype(out2_ref.dtype)

    @pl.when(m == 0)
    def _():
        out1_ref[:, 0:2] = pref1_ref[...].astype(out1_ref.dtype)
        out2_ref[:, 0:1] = pref2_ref[...].astype(out2_ref.dtype)


def moco_fused_logits(pref1, pref2, q, memory_t, T,
                      out_dtype=jnp.float32, tk=None):
    """Returns (out1, out2) with the queue logits written once, in place."""
    B, C = q.shape
    K = memory_t.shape[1]
    assert memory_t.shape[0] == C and K % _LANE == 0 and K >= _LANE
    if tk is None:
        tk = _choose_tk(K, C, B, memory_t.dtype.itemsize,
                        jnp.dtype(out_dtype).itemsize)
    nk = K // tk
    grid = (nk + 1,)                   # +1: ragged tail block holds out1/out2's
    edge_blocks = tk // _LANE          #     trailing 2 / 1 prefix-shifted columns
    cap = _vmem_capacity_bytes()
    kernel = functools.partial(_moco_logits_kernel, inv_T=float(1.0 / T))
    cost = pl.CostEstimate(
        flops=2 * B * C * (K + (nk + 1) * _LANE),
        transcendentals=0,
        bytes_accessed=(K * C * memory_t.dtype.itemsize
                        + B * C * q.dtype.itemsize
                        + B * (2 * K + 3) * jnp.dtype(out_dtype).itemsize))

    return pl.pallas_call(
        kernel,
        out_shape=(jax.ShapeDtypeStruct((B, 2 + K), out_dtype),
                   jax.ShapeDtypeStruct((B, 1 + K), out_dtype)),
        grid_spec=pltpu.PrefetchScalarGridSpec(
            num_scalar_prefetch=0,
            grid=grid,
            in_specs=[
                pl.BlockSpec((B, 2), lambda m: (0, 0)),          # [l_pos, l_neg_1]/T
                pl.BlockSpec((B, 1), lambda m: (0, 0)),          # [l_pos_2]/T
                pl.BlockSpec((B, C), lambda m: (0, 0)),          # q (resident)
                pl.BlockSpec((C, tk),                            # queue tile (streamed)
                             lambda m: (0, jnp.minimum(m, nk - 1))),
                pl.BlockSpec((C, _LANE),                         # last 128 cols of prev tile
                             lambda m: (0, jnp.maximum(m * edge_blocks - 1, 0))),
            ],
            out_specs=[
                pl.BlockSpec((B, tk), lambda m: (0, m)),         # out1 blocks
                pl.BlockSpec((B, tk), lambda m: (0, m)),         # out2 blocks
            ]),
        compiler_params=pltpu.CompilerParams(
            # Each step writes disjoint output blocks -> safe to shard the
            # queue sweep across both TensorCores on v7x; no-op on 1-TC parts.
            # TODO(synk): if xprof shows a single TC on v7x, switch this axis
            # to pltpu.CORE_PARALLEL.
            dimension_semantics=("parallel",),
            vmem_limit_bytes=int(min(0.7 * cap, 112 << 20))),
        cost_estimate=cost,
    )(pref1, pref2, q, memory_t, memory_t)


# ---------------------------------------------------------------------------
# Full forward (k_1 is not None, k_neg is not None path), queue update included
# ---------------------------------------------------------------------------

@functools.partial(jax.jit, static_argnames=("T", "queue_size"),
                   donate_argnums=(4,))                  # donate the queue buffer
def memory_moco_forward(q, k, k_1, k_neg, memory_t, index, T, queue_size):
    """memory_t is the queue stored transposed: shape (C, K), bfloat16."""
    K = memory_t.shape[1]

    # Tiny per-row dots (negligible flops), exact f32 like the torch module.
    l_pos = jnp.sum(q * k, axis=-1, keepdims=True)          # bmm(q, k)
    l_neg_1 = jnp.sum(q * k_neg, axis=-1, keepdims=True)    # bmm(q, k_neg)
    l_pos_2 = jnp.sum(q * k_1, axis=-1, keepdims=True)      # bmm(q, k_1)
    pref1 = jnp.concatenate([l_pos, l_neg_1], axis=1) / T   # (B, 2)
    pref2 = l_pos_2 / T                                     # (B, 1)

    q_mm = q.astype(memory_t.dtype)                         # bf16 MXU operand
    if K % _LANE == 0 and K >= _LANE:
        out1, out2 = moco_fused_logits(pref1, pref2, q_mm, memory_t, T)
    else:
        # TODO(synk): odd queue sizes fall back to plain XLA (never hit for
        # MoCo's power-of-two queues).
        neg2 = jnp.dot(q_mm, memory_t, preferred_element_type=jnp.float32) / T
        out1 = jnp.concatenate([pref1, neg2], axis=1)
        out2 = jnp.concatenate([pref2, neg2], axis=1)

    # Device scalars; convert to Python floats only when actually logging on
    # the host (avoids a blocking device->host sync every training step).
    logging = {"pos": jnp.mean(l_pos), "neg_diff_scene": jnp.mean(l_neg_1)}

    # Queue update (torch: memory.index_copy_(0, out_ids, concat_all_gather(key))).
    # TODO(synk): concat_all_gather is a multi-device all-gather; identity on a
    # single device here.
    key_t = jnp.concatenate([k, k_neg], axis=0).T.astype(memory_t.dtype)  # (C, 2B)
    bs = key_t.shape[1]

    def _contiguous(mem):            # common case: contiguous column slab, in place
        return lax.dynamic_update_slice(mem, key_t, (jnp.int32(0), index))

    def _wrapped(mem):               # rare wrap-around: column scatter
        cols = (index + jnp.arange(bs)) % queue_size
        return mem.at[:, cols].set(key_t)

    new_memory = lax.cond(index + bs <= queue_size, _contiguous, _wrapped, memory_t)
    new_index = (index + bs) % queue_size
    return out1, out2, logging, new_memory, new_index


# ---------------------------------------------------------------------------
# Pure-JAX reference (mirrors the kernel's precision choices)
# ---------------------------------------------------------------------------

def _reference_forward(q, k, k_1, k_neg, memory_t, T):
    l_pos = jnp.sum(q * k, axis=-1, keepdims=True)
    l_pos_2 = jnp.sum(q * k_1, axis=-1, keepdims=True)
    l_neg_1 = jnp.sum(q * k_neg, axis=-1, keepdims=True)
    qm = q.astype(memory_t.dtype).astype(jnp.float32)
    l_neg_2 = qm @ memory_t.astype(jnp.float32)
    out1 = jnp.concatenate([l_pos, l_neg_1, l_neg_2], axis=1) / T
    out2 = jnp.concatenate([l_pos_2, l_neg_2], axis=1) / T
    return out1, out2


if __name__ == "__main__":
    # Small deterministic synthetic setup consistent with the module.
    inputSize = 32      # C
    queueSize = 256     # K
    B = 8               # batch
    T = 0.07

    key0 = jax.random.PRNGKey(0)
    kq, kk, kk1, kkn, kmem = jax.random.split(key0, 5)

    q = jax.random.normal(kq, (B, inputSize), dtype=jnp.float32)
    k = jax.random.normal(kk, (B, inputSize), dtype=jnp.float32)
    k_1 = jax.random.normal(kk1, (B, inputSize), dtype=jnp.float32)
    k_neg = jax.random.normal(kkn, (B, inputSize), dtype=jnp.float32)

    # memory init: uniform in [-stdv, stdv]; stored transposed (C, K) in bf16.
    stdv = 1.0 / math.sqrt(inputSize / 3)
    memory = jax.random.uniform(
        kmem, (queueSize, inputSize), dtype=jnp.float32,
        minval=-stdv, maxval=stdv)
    memory_t = memory.T.astype(jnp.bfloat16)

    # Compute the reference BEFORE the forward call: memory_t is donated
    # (invalidated) by the jitted forward.
    r1, r2 = _reference_forward(q, k, k_1, k_neg, memory_t, T)
    expected_new_cols = jnp.concatenate([k, k_neg], axis=0).T.astype(jnp.bfloat16)

    out1, out2, logging, new_memory, new_index = memory_moco_forward(
        q, k, k_1, k_neg, memory_t, jnp.int32(0), T=T, queue_size=queueSize)
    jax.block_until_ready((out1, out2, new_memory, new_index, logging))

    # Sanity checks against the pure-JAX reference.
    assert out1.shape == (B, 2 + queueSize) and out2.shape == (B, 1 + queueSize)
    assert jnp.allclose(out1, r1, rtol=2e-3, atol=2e-3), \
        float(jnp.max(jnp.abs(out1 - r1)))
    assert jnp.allclose(out2, r2, rtol=2e-3, atol=2e-3), \
        float(jnp.max(jnp.abs(out2 - r2)))
    # Queue update: first 2B columns of the transposed queue replaced by [k, k_neg].T
    assert jnp.allclose(new_memory[:, :2 * B].astype(jnp.float32),
                        expected_new_cols.astype(jnp.float32))
    assert int(new_index) == 2 * B

    print("KERNEL_OK")
</pallas_src>

<mosaic_0001>
module attributes {stable_mosaic.version = 11 : i64} {
  func.func @_moco_logits_kernel(%arg0: i32, %arg1: memref<8x2xf32, #tpu.memory_space<vmem>>, %arg2: memref<8x1xf32, #tpu.memory_space<vmem>>, %arg3: memref<8x32xbf16, #tpu.memory_space<vmem>>, %arg4: memref<32x128xbf16, #tpu.memory_space<vmem>>, %arg5: memref<32x128xbf16, #tpu.memory_space<vmem>>, %arg6: memref<8x128xf32, #tpu.memory_space<vmem>>, %arg7: memref<8x128xf32, #tpu.memory_space<vmem>>) attributes {dimension_semantics = [#tpu.dimension_semantics<parallel>], iteration_bounds = array<i64: 3>, scalar_prefetch = 0 : i64, scratch_operands = 0 : i64, tpu.core_type = #tpu.core_type<tc>, window_params = [{pipeline_mode = #tpu.pipeline_mode<synchronous>, transform_indices = @transform_0, window_bounds = array<i64: 8, 2>}, {pipeline_mode = #tpu.pipeline_mode<synchronous>, transform_indices = @transform_1, window_bounds = array<i64: 8, 1>}, {pipeline_mode = #tpu.pipeline_mode<synchronous>, transform_indices = @transform_2, window_bounds = array<i64: 8, 32>}, {transform_indices = @transform_3, window_bounds = array<i64: 32, 128>}, {transform_indices = @transform_4, window_bounds = array<i64: 32, 128>}, {transform_indices = @transform_5, window_bounds = array<i64: 8, 128>}, {transform_indices = @transform_6, window_bounds = array<i64: 8, 128>}]} {
    %c0 = arith.constant 0 : index
    %c0_0 = arith.constant 0 : index
    %0 = vector.load %arg3[%c0, %c0_0] : memref<8x32xbf16, #tpu.memory_space<vmem>>, vector<8x32xbf16>
    %c0_1 = arith.constant 0 : index
    %c0_2 = arith.constant 0 : index
    %1 = vector.load %arg4[%c0_1, %c0_2] : memref<32x128xbf16, #tpu.memory_space<vmem>>, vector<32x128xbf16>
    %cst = arith.constant dense<0.000000e+00> : vector<8x128xf32>
    %2 = tpu.matmul %0, %1, %cst {dimension_numbers = #tpu.dot_dimension_numbers<[1], [0], [0], [1], [0, 0, 1, 1], [], []>} : vector<8x32xbf16>, vector<32x128xbf16>, vector<8x128xf32> -> vector<8x128xf32>
    %cst_3 = arith.constant 14.2857141 : f32
    %3 = vector.broadcast %cst_3 : f32 to vector<8x128xf32>
    %4 = arith.mulf %2, %3 : vector<8x128xf32>
    %c0_4 = arith.constant 0 : index
    %c0_5 = arith.constant 0 : index
    %5 = vector.load %arg5[%c0_4, %c0_5] : memref<32x128xbf16, #tpu.memory_space<vmem>>, vector<32x128xbf16>
    %cst_6 = arith.constant dense<0.000000e+00> : vector<8x128xf32>
    %6 = tpu.matmul %0, %5, %cst_6 {dimension_numbers = #tpu.dot_dimension_numbers<[1], [0], [0], [1], [0, 0, 1, 1], [], []>} : vector<8x32xbf16>, vector<32x128xbf16>, vector<8x128xf32> -> vector<8x128xf32>
    %cst_7 = arith.constant 14.2857141 : f32
    %7 = vector.broadcast %cst_7 : f32 to vector<8x128xf32>
    %8 = arith.mulf %6, %7 : vector<8x128xf32>
    %c2_i32 = arith.constant 2 : i32
    %9 = tpu.dynamic_rotate %4 by %c2_i32 dim 1 : vector<8x128xf32>, i32 -> vector<8x128xf32>
    %c0_8 = arith.constant 0 : index
    %c0_9 = arith.constant 0 : index
    %10 = vector.load %arg6[%c0_8, %c0_9] : memref<8x128xf32, #tpu.memory_space<vmem>>, vector<8x128xf32>
    tpu.vector_store %arg6[%c0_8, %c0_9], %9 {strides = array<i32>} : memref<8x128xf32, #tpu.memory_space<vmem>>, vector<8x128xf32>,
    %c1_i32 = arith.constant 1 : i32
    %11 = tpu.dynamic_rotate %4 by %c1_i32 dim 1 : vector<8x128xf32>, i32 -> vector<8x128xf32>
    %c0_10 = arith.constant 0 : index
    %c0_11 = arith.constant 0 : index
    %12 = vector.load %arg7[%c0_10, %c0_11] : memref<8x128xf32, #tpu.memory_space<vmem>>, vector<8x128xf32>
    tpu.vector_store %arg7[%c0_10, %c0_11], %11 {strides = array<i32>} : memref<8x128xf32, #tpu.memory_space<vmem>>, vector<8x128xf32>,
    %13 = vector.extract_strided_slice %8 {offsets = [0, 126], sizes = [8, 2], strides = [1, 1]} : vector<8x128xf32> to vector<8x2xf32>
    %c0_12 = arith.constant 0 : index
    %c0_13 = arith.constant 0 : index
    %14 = vector.load %arg6[%c0_12, %c0_13] : memref<8x128xf32, #tpu.memory_space<vmem>>, vector<8x2xf32>
    tpu.vector_store %arg6[%c0_12, %c0_13], %13 {strides = array<i32>} : memref<8x128xf32, #tpu.memory_space<vmem>>, vector<8x2xf32>,
    %15 = vector.extract_strided_slice %8 {offsets = [0, 127], sizes = [8, 1], strides = [1, 1]} : vector<8x128xf32> to vector<8x1xf32>
    %c0_14 = arith.constant 0 : index
    %c0_15 = arith.constant 0 : index
    %16 = vector.load %arg7[%c0_14, %c0_15] : memref<8x128xf32, #tpu.memory_space<vmem>>, vector<8x1xf32>
    tpu.vector_store %arg7[%c0_14, %c0_15], %15 {strides = array<i32>} : memref<8x128xf32, #tpu.memory_space<vmem>>, vector<8x1xf32>,
    %c0_i32 = arith.constant 0 : i32
    %17 = arith.cmpi eq, %arg0, %c0_i32 : i32
    %18 = arith.extui %17 : i1 to i32
    %c0_i32_16 = arith.constant 0 : i32
    %19 = arith.cmpi ne, %18, %c0_i32_16 : i32
    scf.if %19 {
      %c0_17 = arith.constant 0 : index
      %c0_18 = arith.constant 0 : index
      %20 = vector.load %arg1[%c0_17, %c0_18] : memref<8x2xf32, #tpu.memory_space<vmem>>, vector<8x2xf32>
      %c0_19 = arith.constant 0 : index
      %c0_20 = arith.constant 0 : index
      %21 = vector.load %arg6[%c0_19, %c0_20] : memref<8x128xf32, #tpu.memory_space<vmem>>, vector<8x2xf32>
      tpu.vector_store %arg6[%c0_19, %c0_20], %20 {strides = array<i32>} : memref<8x128xf32, #tpu.memory_space<vmem>>, vector<8x2xf32>,
      %c0_21 = arith.constant 0 : index
      %c0_22 = arith.constant 0 : index
      %22 = vector.load %arg2[%c0_21, %c0_22] : memref<8x1xf32, #tpu.memory_space<vmem>>, vector<8x1xf32>
      %c0_23 = arith.constant 0 : index
      %c0_24 = arith.constant 0 : index
      %23 = vector.load %arg7[%c0_23, %c0_24] : memref<8x128xf32, #tpu.memory_space<vmem>>, vector<8x1xf32>
      tpu.vector_store %arg7[%c0_23, %c0_24], %22 {strides = array<i32>} : memref<8x128xf32, #tpu.memory_space<vmem>>, vector<8x1xf32>,
    } else {
    }
    return
  }
  func.func @transform_0(%arg0: i32) -> (i32, i32) {
    %c0_i32 = arith.constant 0 : i32
    %c0_i32_0 = arith.constant 0 : i32
    %c0_i32_1 = arith.constant 0 : i32
    return %c0_i32, %c0_i32_0 : i32, i32
  }
  func.func @transform_1(%arg0: i32) -> (i32, i32) {
    %c0_i32 = arith.constant 0 : i32
    %c0_i32_0 = arith.constant 0 : i32
    %c0_i32_1 = arith.constant 0 : i32
    return %c0_i32, %c0_i32_0 : i32, i32
  }
  func.func @transform_2(%arg0: i32) -> (i32, i32) {
    %c0_i32 = arith.constant 0 : i32
    %c0_i32_0 = arith.constant 0 : i32
    %c0_i32_1 = arith.constant 0 : i32
    return %c0_i32, %c0_i32_0 : i32, i32
  }
  func.func @transform_3(%arg0: i32) -> (i32, i32) {
    %c1_i32 = arith.constant 1 : i32
    %0 = arith.minsi %arg0, %c1_i32 : i32
    %c0_i32 = arith.constant 0 : i32
    %c0_i32_0 = arith.constant 0 : i32
    return %c0_i32, %0 : i32, i32
  }
  func.func @transform_4(%arg0: i32) -> (i32, i32) {
    %c1_i32 = arith.constant 1 : i32
    %0 = arith.muli %arg0, %c1_i32 : i32
    %c1_i32_0 = arith.constant 1 : i32
    %1 = arith.subi %0, %c1_i32_0 : i32
    %c0_i32 = arith.constant 0 : i32
    %2 = arith.maxsi %1, %c0_i32 : i32
    %c0_i32_1 = arith.constant 0 : i32
    %c0_i32_2 = arith.constant 0 : i32
    return %c0_i32_1, %2 : i32, i32
  }
  func.func @transform_5(%arg0: i32) -> (i32, i32) {
    %c0_i32 = arith.constant 0 : i32
    %c0_i32_0 = arith.constant 0 : i32
    return %c0_i32, %arg0 : i32, i32
  }
  func.func @transform_6(%arg0: i32) -> (i32, i32) {
    %c0_i32 = arith.constant 0 : i32
    %c0_i32_0 = arith.constant 0 : i32
    return %c0_i32, %arg0 : i32, i32
  }
}

</mosaic_0001>

<llo_original>
// kernel: memory_moco_forward.1
$region0: #{memory_moco_forward.1}
  #allocation0 [shape = 'u32[]', space=smem, size = 0x4, offset = 0x4, fixed_abs, tag = 'smem constant byte address 0x4 - core index']
  #allocation1 [shape = 'u32[144,128]{1,0:T(1,128)}', space=vmem, size = 0x12000, scoped, tag = 'internal scratch']
  %s0 = inlined_call_operand.vmem [shape: f32[8,2], index: 0, kind: input, shape index: {}]
  %s1 = inlined_call_operand.vmem [shape: f32[8,1], index: 1, kind: input, shape index: {}]
  %s2 = inlined_call_operand.vmem [shape: bf16[8,32], index: 2, kind: input, shape index: {}]
  %s3 = inlined_call_operand.hbm [shape: bf16[32,256], index: 3, kind: input, shape index: {}, may-alias: {3,4}]
  %s4 = inlined_call_operand.hbm [shape: bf16[32,256], index: 4, kind: input, shape index: {}, may-alias: {3,4}]
  %s5 = inlined_call_operand.hbm [shape: f32[8,258], index: 5, kind: output, shape index: {0}]
  %s6 = inlined_call_operand.hbm [shape: f32[8,257], index: 6, kind: output, shape index: {1}]
  %7 = xla_tuple %s5, %s6
  %s8 = sld [smem:[#allocation0]]
  $region73: #{memory_moco_forward.1} parent=0
    _
  %s10 = ssub.s32 1, %s8
  %s11 = scalar_select 0, %s10, %s8
  $region1: #{memory_moco_forward.1} parent=0
    #allocation2 [shape = 'u8[16384]{0}', space=vmem, size = 0x4000, scoped, tag = 'input window, operand 3']
    #allocation3 [shape = 's32[2]{0}', space=sflag, size = 0x8, scoped, tag = 'scoped memory for memory_moco_forward.1']
    #allocation4 [shape = 's32[2]{0}', space=sflag, size = 0x8, scoped, tag = 'scoped memory for memory_moco_forward.1']
    #allocation5 [shape = 'u8[16384]{0}', space=vmem, size = 0x4000, scoped, tag = 'input window, operand 4']
    #allocation6 [shape = 's32[2]{0}', space=sflag, size = 0x8, scoped, tag = 'scoped memory for memory_moco_forward.1']
    #allocation7 [shape = 'u8[8192]{0}', space=vmem, size = 0x2000, scoped, tag = 'output window, operand 0']
    #allocation8 [shape = 'u8[8192]{0}', space=vmem, size = 0x2000, scoped, tag = 'output window, operand 1']
    #allocation9 [shape = 's32[2]{0}', space=sflag, size = 0x8, scoped, tag = 'scoped memory for memory_moco_forward.1']
    %12 = vsyncpa [#allocation3], 0
    %s13 = scalar_lea.sflag [#allocation3], 1
    %14 = vsyncpa %s13, 0
    %15 = vsyncpa [#allocation6], 0
    %s16 = scalar_lea.sflag [#allocation6], 1
    %17 = vsyncpa %s16, 0
    %18 = vsyncpa [#allocation4], 0
    %s19 = scalar_lea.sflag [#allocation4], 1
    %20 = vsyncpa %s19, 0
    %21 = vsyncpa [#allocation9], 0
    %s22 = scalar_lea.sflag [#allocation9], 1
    %23 = vsyncpa %s22, 0
    loop: start=0, step=1, limit=5
    $region2: #{memory_moco_forward.1} parent=1 // loop_pre_header
      _
    $region3: #{memory_moco_forward.1} parent=1 // loop_header
      %s25 = sphi 0, %s29
      %p26 = scmp.ge.s32.totalorder %s25, 5
      %s33 = sphi 0, %s33
      %s35 = sphi 0, %s33
      %s36 = sphi 0, %s35
      %s50 = sphi 0, %s36
      %s54 = sphi 0, %s54
      %s56 = sphi 0, %s54
      %s57 = sphi 0, %s56
      %s71 = sphi 0, %s57
      %s75 = sphi 0, %s75
      %s77 = sphi 0, %s75
      %s78 = sphi 0, %s77
      %s92 = sphi 0, %s78
      %s102 = sphi 0, %s104
      %s105 = sphi 0, %s102
      %s106 = sphi 0, %s105
      %s122 = sphi 0, %s106
      %s134 = sphi 0, %s136
      %s137 = sphi 0, %s134
      %s138 = sphi 0, %s137
      %s154 = sphi 0, %s138
      %s160 = sphi 0, %s162
      %s163 = sphi 0, %s160
      %s164 = sphi 0, %s163
      %s180 = sphi 0, %s164
      %s186 = sphi 0, %s188
      %s189 = sphi 0, %s186
      %s190 = sphi 0, %s189
      %s206 = sphi 0, %s190
    $region4: #{memory_moco_forward.1} parent=1 // loop_header_branch
      %28 = sbr.rel (%p26) target = $region8
    $region5: #{memory_moco_forward.1} parent=1 // loop_body
      %s30 = ssub.s32 %s25, 1
      %s31 = ssub.s32 %s25, 2
      %s32 = sadd.s32 %s25, 1
      %s34 = sadd.s32 %s33, 1
      %p37 = scmp.eq.s32.totalorder %s25, 2
      %p38 = scmp.ne.s32.totalorder %s33, %s35
      %p39 = scmp.eq.s32.totalorder %s25, 0
      %p40 = por %p38, %p39
      %p41 = scmp.ne.s32.totalorder %s33, %s35
      %p42 = scmp.eq.s32.totalorder %s30, 2
      %p43 = por %p41, %p42
      %p44 = scmp.ne.s32.totalorder %s35, %s36
      %p45 = scmp.eq.s32.totalorder %s30, 0
      %p46 = por %p44, %p45
      %p47 = scmp.ne.s32.totalorder %s35, %s36
      %p48 = scmp.eq.s32.totalorder %s31, 2
      %p49 = por %p47, %p48
      %p51 = scmp.ne.s32.totalorder %s36, %s50
      %p52 = scmp.eq.s32.totalorder %s31, 0
      %p53 = por %p51, %p52
      %s55 = sadd.s32 %s54, 1
      %p58 = scmp.eq.s32.totalorder %s25, 2
      %p59 = scmp.ne.s32.totalorder %s54, %s56
      %p60 = scmp.eq.s32.totalorder %s25, 0
      %p61 = por %p59, %p60
      %p62 = scmp.ne.s32.totalorder %s54, %s56
      %p63 = scmp.eq.s32.totalorder %s30, 2
      %p64 = por %p62, %p63
      %p65 = scmp.ne.s32.totalorder %s56, %s57
      %p66 = scmp.eq.s32.totalorder %s30, 0
      %p67 = por %p65, %p66
      %p68 = scmp.ne.s32.totalorder %s56, %s57
      %p69 = scmp.eq.s32.totalorder %s31, 2
      %p70 = por %p68, %p69
      %p72 = scmp.ne.s32.totalorder %s57, %s71
      %p73 = scmp.eq.s32.totalorder %s31, 0
      %p74 = por %p72, %p73
      %s76 = sadd.s32 %s75, 1
      %p79 = scmp.eq.s32.totalorder %s25, 2
      %p80 = scmp.ne.s32.totalorder %s75, %s77
      %p81 = scmp.eq.s32.totalorder %s25, 0
      %p82 = por %p80, %p81
      %p83 = scmp.ne.s32.totalorder %s75, %s77
      %p84 = scmp.eq.s32.totalorder %s30, 2
      %p85 = por %p83, %p84
      %p86 = scmp.ne.s32.totalorder %s77, %s78
      %p87 = scmp.eq.s32.totalorder %s30, 0
      %p88 = por %p86, %p87
      %p89 = scmp.ne.s32.totalorder %s77, %s78
      %p90 = scmp.eq.s32.totalorder %s31, 2
      %p91 = por %p89, %p90
      %p93 = scmp.ne.s32.totalorder %s78, %s92
      %p94 = scmp.eq.s32.totalorder %s31, 0
      %p95 = por %p93, %p94
      %p96 = scmp.lt.s32.totalorder %s25, 1
      %s97 = scalar_select %p96, %s25, 1
      %p98 = scmp.lt.s32.totalorder %s32, 1
      %s99 = scalar_select %p98, %s32, 1
      %s100 = ssub.s32 %s97, %s99
      %p101 = scmp.eq.s32.totalorder %s100, 0
      %s103 = sadd.s32 %s102, 1
      %s104 = scalar_select %p101, %s102, %s103
      %p107 = pneg %p101
      %p108 = scmp.eq.s32.totalorder %s25, 2
      %p109 = por %p107, %p108
      %p110 = scmp.ne.s32.totalorder %s102, %s105
      %p111 = scmp.eq.s32.totalorder %s25, 0
      %p112 = por %p110, %p111
      %p113 = scmp.ne.s32.totalorder %s102, %s105
      %p114 = scmp.eq.s32.totalorder %s30, 2
      %p115 = por %p113, %p114
      %p116 = scmp.ne.s32.totalorder %s105, %s106
      %p117 = scmp.eq.s32.totalorder %s30, 0
      %p118 = por %p116, %p117
      %p119 = scmp.ne.s32.totalorder %s105, %s106
      %p120 = scmp.eq.s32.totalorder %s31, 2
      %p121 = por %p119, %p120
      %p123 = scmp.ne.s32.totalorder %s106, %s122
      %p124 = scmp.eq.s32.totalorder %s31, 0
      %p125 = por %p123, %p124
      %s126 = ssub.s32 %s25, 1
      %p127 = scmp.gt.s32.totalorder %s126, 0
      %s128 = scalar_select %p127, %s126, 0
      %s129 = ssub.s32 %s32, 1
      %p130 = scmp.gt.s32.totalorder %s129, 0
      %s131 = scalar_select %p130, %s129, 0
      %s132 = ssub.s32 %s128, %s131
      %p133 = scmp.eq.s32.totalorder %s132, 0
      %s135 = sadd.s32 %s134, 1
      %s136 = scalar_select %p133, %s134, %s135
      %p139 = pneg %p133
      %p140 = scmp.eq.s32.totalorder %s25, 2
      %p141 = por %p139, %p140
      %p142 = scmp.ne.s32.totalorder %s134, %s137
      %p143 = scmp.eq.s32.totalorder %s25, 0
      %p144 = por %p142, %p143
      %p145 = scmp.ne.s32.totalorder %s134, %s137
      %p146 = scmp.eq.s32.totalorder %s30, 2
      %p147 = por %p145, %p146
      %p148 = scmp.ne.s32.totalorder %s137, %s138
      %p149 = scmp.eq.s32.totalorder %s30, 0
      %p150 = por %p148, %p149
      %p151 = scmp.ne.s32.totalorder %s137, %s138
      %p152 = scmp.eq.s32.totalorder %s31, 2
      %p153 = por %p151, %p152
      %p155 = scmp.ne.s32.totalorder %s138, %s154
      %p156 = scmp.eq.s32.totalorder %s31, 0
      %p157 = por %p155, %p156
      %s158 = ssub.s32 %s25, %s32
      %p159 = scmp.eq.s32.totalorder %s158, 0
      %s161 = sadd.s32 %s160, 1
      %s162 = scalar_select %p159, %s160, %s161
      %p165 = pneg %p159
      %p166 = scmp.eq.s32.totalorder %s25, 2
      %p167 = por %p165, %p166
      %p168 = scmp.ne.s32.totalorder %s160, %s163
      %p169 = scmp.eq.s32.totalorder %s25, 0
      %p170 = por %p168, %p169
      %p171 = scmp.ne.s32.totalorder %s160, %s163
      %p172 = scmp.eq.s32.totalorder %s30, 2
      %p173 = por %p171, %p172
      %p174 = scmp.ne.s32.totalorder %s163, %s164
      %p175 = scmp.eq.s32.totalorder %s30, 0
      %p176 = por %p174, %p175
      %p177 = scmp.ne.s32.totalorder %s163, %s164
      %p178 = scmp.eq.s32.totalorder %s31, 2
      %p179 = por %p177, %p178
      %p181 = scmp.ne.s32.totalorder %s164, %s180
      %p182 = scmp.eq.s32.totalorder %s31, 0
      %p183 = por %p181, %p182
      %s184 = ssub.s32 %s25, %s32
      %p185 = scmp.eq.s32.totalorder %s184, 0
      %s187 = sadd.s32 %s186, 1
      %s188 = scalar_select %p185, %s186, %s187
      %p191 = pneg %p185
      %p192 = scmp.eq.s32.totalorder %s25, 2
      %p193 = por %p191, %p192
      %p194 = scmp.ne.s32.totalorder %s186, %s189
      %p195 = scmp.eq.s32.totalorder %s25, 0
      %p196 = por %p194, %p195
      %p197 = scmp.ne.s32.totalorder %s186, %s189
      %p198 = scmp.eq.s32.totalorder %s30, 2
      %p199 = por %p197, %p198
      %p200 = scmp.ne.s32.totalorder %s189, %s190
      %p201 = scmp.eq.s32.totalorder %s30, 0
      %p202 = por %p200, %p201
      %p203 = scmp.ne.s32.totalorder %s189, %s190
      %p204 = scmp.eq.s32.totalorder %s31, 2
      %p205 = por %p203, %p204
      %p207 = scmp.ne.s32.totalorder %s190, %s206
      %p208 = scmp.eq.s32.totalorder %s31, 0
      %p209 = por %p207, %p208
      %p210 = scmp.le.s32.totalorder 1, %s25
      %p211 = scmp.lt.s32.totalorder %s25, 4
      %p212 = pnand %p210, %p211
      %p213 = pneg %p212
      // Predicated region
      $region9: #{memory_moco_forward.1} parent=5 // pred_check
        _
      $region10: #{memory_moco_forward.1} parent=5 // pred_check_branch
        %215 = sbr.rel (%p212) target = $region12
      $region11: #{memory_moco_forward.1} parent=5 // pred_region
        %s216 = ssub.s32 %s25, 1
        // Predicated region
        $region13: #{memory_moco_forward.1} parent=11 // pred_check
          %p217 = pneg %p46
        $region14: #{memory_moco_forward.1} parent=11 // pred_check_branch
          %219 = sbr.rel (%p217) target = $region16
        $region15: #{memory_moco_forward.1} parent=11 // pred_region
          _
        $region16: #{memory_moco_forward.1} parent=11 // pred_fallthru
          _
        // Predicated region
        $region17: #{memory_moco_forward.1} parent=11 // pred_check
          %p220 = pneg %p67
        $region18: #{memory_moco_forward.1} parent=11 // pred_check_branch
          %222 = sbr.rel (%p220) target = $region20
        $region19: #{memory_moco_forward.1} parent=11 // pred_region
          _
        $region20: #{memory_moco_forward.1} parent=11 // pred_fallthru
          _
        // Predicated region
        $region21: #{memory_moco_forward.1} parent=11 // pred_check
          %p223 = pneg %p88
        $region22: #{memory_moco_forward.1} parent=11 // pred_check_branch
          %225 = sbr.rel (%p223) target = $region24
        $region23: #{memory_moco_forward.1} parent=11 // pred_region
          _
        $region24: #{memory_moco_forward.1} parent=11 // pred_fallthru
          _
      $region12: #{memory_moco_forward.1} parent=5 // pred_fallthru
        _
      %p226 = scmp.lt.s32.totalorder %s25, 3
      // Predicated region
      $region25: #{memory_moco_forward.1} parent=5 // pred_check
        %p227 = pneg %p226
      $region26: #{memory_moco_forward.1} parent=5 // pred_check_branch
        %229 = sbr.rel (%p227) target = $region28
      $region27: #{memory_moco_forward.1} parent=5 // pred_region
        // Predicated region
        $region29: #{memory_moco_forward.1} parent=27 // pred_check
          %p230 = pneg %p112
        $region30: #{memory_moco_forward.1} parent=27 // pred_check_branch
          %232 = sbr.rel (%p230) target = $region32
        $region31: #{memory_moco_forward.1} parent=27 // pred_region
          %s233 = sand.u32 %s102, 1
          %s234 = scalar_lea.sflag [#allocation3], %s233
          %s235 = sand.u32 %s102, 1
          %s236 = smul.addr %s235, 16
          %s237 = scalar_lea.vmem [#allocation2], %s236
          %p238 = scmp.lt.s32.totalorder %s25, 1
          %s239 = scalar_select %p238, %s25, 1
          %s241 = ssub.s32 256, 256
          %242 = vsyncadd %s234, %s241
          %s243 = smul.addr %s239, 64
          %s244 = scalar_lea.hbm %s3, %s243
          %s245 = sshll.u32 %s237, 4
          %s246 = int_to_ptr.vmem [resolvable:$true] %s245
          %251 = dma.hbm_to_vmem [thread:$0]  %s244, 256, %s246, %s234, 128, 64, 4
        $region32: #{memory_moco_forward.1} parent=27 // pred_fallthru
          _
        // Predicated region
        $region33: #{memory_moco_forward.1} parent=27 // pred_check
          %p252 = pneg %p144
        $region34: #{memory_moco_forward.1} parent=27 // pred_check_branch
          %254 = sbr.rel (%p252) target = $region36
        $region35: #{memory_moco_forward.1} parent=27 // pred_region
          %s255 = sand.u32 %s134, 1
          %s256 = scalar_lea.sflag [#allocation6], %s255
          %s257 = sand.u32 %s134, 1
          %s258 = smul.addr %s257, 16
          %s259 = scalar_lea.vmem [#allocation5], %s258
          %s260 = ssub.s32 %s25, 1
          %p261 = scmp.gt.s32.totalorder %s260, 0
          %s262 = scalar_select %p261, %s260, 0
          %s264 = ssub.s32 256, 256
          %265 = vsyncadd %s256, %s264
          %s266 = smul.addr %s262, 64
          %s267 = scalar_lea.hbm %s4, %s266
          %s268 = sshll.u32 %s259, 4
          %s269 = int_to_ptr.vmem [resolvable:$true] %s268
          %274 = dma.hbm_to_vmem [thread:$0]  %s267, 256, %s269, %s256, 128, 64, 4
        $region36: #{memory_moco_forward.1} parent=27 // pred_fallthru
          _
      $region28: #{memory_moco_forward.1} parent=5 // pred_fallthru
        _
      %p275 = scmp.le.s32.totalorder 1, %s25
      %p276 = scmp.lt.s32.totalorder %s25, 4
      %p277 = pnand %p275, %p276
      %p278 = pneg %p277
      // Predicated region
      $region37: #{memory_moco_forward.1} parent=5 // pred_check
        _
      $region38: #{memory_moco_forward.1} parent=5 // pred_check_branch
        %280 = sbr.rel (%p277) target = $region40
      $region39: #{memory_moco_forward.1} parent=5 // pred_region
        %s281 = ssub.s32 %s25, 1
        %s282 = sand.u32 %s105, 1
        %s283 = scalar_lea.sflag [#allocation3], %s282
        %s284 = sand.u32 %s105, 1
        %s285 = smul.addr %s284, 16
        %s286 = scalar_lea.vmem [#allocation2], %s285
        // Predicated region
        $region41: #{memory_moco_forward.1} parent=39 // pred_check
          %p287 = pneg %p118
        $region42: #{memory_moco_forward.1} parent=39 // pred_check_branch
          %289 = sbr.rel (%p287) target = $region44
        $region43: #{memory_moco_forward.1} parent=39 // pred_region
          %290 = dma.done %s283, 256
        $region44: #{memory_moco_forward.1} parent=39 // pred_fallthru
          _
        %s291 = sand.u32 %s137, 1
        %s292 = scalar_lea.sflag [#allocation6], %s291
        %s293 = sand.u32 %s137, 1
        %s294 = smul.addr %s293, 16
        %s295 = scalar_lea.vmem [#allocation5], %s294
        // Predicated region
        $region45: #{memory_moco_forward.1} parent=39 // pred_check
          %p296 = pneg %p150
        $region46: #{memory_moco_forward.1} parent=39 // pred_check_branch
          %298 = sbr.rel (%p296) target = $region48
        $region47: #{memory_moco_forward.1} parent=39 // pred_region
          %299 = dma.done %s292, 256
        $region48: #{memory_moco_forward.1} parent=39 // pred_fallthru
          _
        %p300 = pneg %p46
        %p301 = pneg %p43
        %p302 = pneg %p67
        %p303 = pneg %p64
        %p304 = pneg %p88
        %p305 = pneg %p85
        %s306 = sand.u32 %s105, 1
        %s307 = scalar_lea.sflag [#allocation3], %s306
        %s308 = sand.u32 %s105, 1
        %s309 = smul.addr %s308, 16
        %s310 = scalar_lea.vmem [#allocation2], %s309
        %p311 = pneg %p118
        %p312 = pneg %p115
        %s313 = sand.u32 %s137, 1
        %s314 = scalar_lea.sflag [#allocation6], %s313
        %s315 = sand.u32 %s137, 1
        %s316 = smul.addr %s315, 16
        %s317 = scalar_lea.vmem [#allocation5], %s316
        %p318 = pneg %p150
        %p319 = pneg %p147
        %p320 = pneg %p176
        %p321 = pneg %p173
        %s322 = sand.u32 %s163, 1
        %s323 = scalar_lea.sflag [#allocation4], %s322
        %s324 = sand.u32 %s163, 1
        %s325 = smul.addr %s324, 8
        %s326 = scalar_lea.vmem [#allocation7], %s325
        %p327 = pneg %p202
        %p328 = pneg %p199
        %s329 = sand.u32 %s189, 1
        %s330 = scalar_lea.sflag [#allocation9], %s329
        %s331 = sand.u32 %s189, 1
        %s332 = smul.addr %s331, 8
        %s333 = scalar_lea.vmem [#allocation8], %s332
        %p334 = scmp.lt.s32.totalorder %s30, 1
        %s335 = scalar_select %p334, %s30, 1
        %s336 = ssub.s32 %s30, 1
        %p337 = scmp.gt.s32.totalorder %s336, 0
        %s338 = scalar_select %p337, %s336, 0
        %v340 = vld [vmem:[%s2] sm:$0xf]
        %v341 = vld [vmem:[%s286] sm:$0xf]
        %v342 = vld [vmem:[%s286 + $0x4] sm:$0xf]
        %v343 = vld [vmem:[%s286 + $0x8] sm:$0xf]
        %v344 = vld [vmem:[%s286 + $0xc] sm:$0xf]
        %v349 = vunpack.c.l.b16 %v341
        %v350 = vunpack.c.l.b16 %v342
        %v351 = vunpack.c.l.b16 %v343
        %v352 = vunpack.c.l.b16 %v344
        %v353 = vpack.c.b16 %v350, %v349
        %v354 = vpack.c.b16 %v352, %v351
        %vm357 = vcmask 261120
        %v359 = vsel %vm357, %v340, 0
        %361 = vmatprep.subr.bf16.mxu0 0
        %362 = vmatpush1.bf16.msra.mxu0 %v353
        %363 = vmatprep.subr.bf16.mxu0 0
        %364 = vmatpush1.bf16.msra.mxu0 %v354
        %365 = vmatprep.subr.bf16.mxu0 0
        %366 = vmatpush1.bf16.msra.mxu0 0
        %367 = vmatprep.subr.bf16.mxu0 0
        %368 = vmatpush1.bf16.msra.mxu0 0
        %369 = vmatprep.subr.bf16.mxu0 0
        %370 = vmatpush1.bf16.msra.mxu0 0
        %371 = vmatprep.subr.bf16.mxu0 0
        %372 = vmatpush1.bf16.msra.mxu0 0
        %373 = vmatprep.subr.bf16.mxu0 0
        %374 = vmatpush1.bf16.msra.mxu0 0
        %375 = vmatprep.subr.bf16.mxu0 0
        %376 = vmatpush1.bf16.msra.mxu0 0
        %377 = vmatprep.subr.bf16.mxu0 0
        %378 = vmatpush1.bf16.msra.mxu0 0
        %379 = vmatprep.subr.bf16.mxu0 0
        %380 = vmatpush1.bf16.msra.mxu0 0
        %381 = vmatprep.subr.bf16.mxu0 0
        %382 = vmatpush1.bf16.msra.mxu0 0
        %383 = vmatprep.subr.bf16.mxu0 0
        %384 = vmatpush1.bf16.msra.mxu0 0
        %385 = vmatprep.subr.bf16.mxu0 0
        %386 = vmatpush1.bf16.msra.mxu0 0
        %387 = vmatprep.subr.bf16.mxu0 0
        %388 = vmatpush1.bf16.msra.mxu0 0
        %389 = vmatprep.subr.bf16.mxu0 0
        %390 = vmatpush1.bf16.msra.mxu0 0
        %391 = vmatprep.subr.bf16.mxu0 0
        %392 = vmatpush1.bf16.msra.mxu0 0
        %393 = vmatprep.mubr.bf16.mxu0 0
        %394 = vmatmul.mubr.bf16.gmra.mrb[0].mxu0 %v359
        %v395 = vpop.f32.mrb[0].mxu0
        %v396 = vadd.f32 0.0, %v395
        %v397 = vpop.f32.mrb[0].mxu0
        %v398 = vpop.f32.mrb[0].mxu0
        %v399 = vpop.f32.mrb[0].mxu0
        %400 = vdwg.mxu0
        %v401 = vmul.f32 %v396, 14.285714
        %v402 = vld [vmem:[%s295] sm:$0xf]
        %v403 = vld [vmem:[%s295 + $0x4] sm:$0xf]
        %v404 = vld [vmem:[%s295 + $0x8] sm:$0xf]
        %v405 = vld [vmem:[%s295 + $0xc] sm:$0xf]
        %v410 = vunpack.c.l.b16 %v402
        %v411 = vunpack.c.l.b16 %v403
        %v412 = vunpack.c.l.b16 %v404
        %v413 = vunpack.c.l.b16 %v405
        %v414 = vpack.c.b16 %v411, %v410
        %v415 = vpack.c.b16 %v413, %v412
        %418 = vmatprep.subr.bf16.mxu0 0
        %419 = vmatpush1.bf16.msra.mxu0 %v414
        %420 = vmatprep.subr.bf16.mxu0 0
        %421 = vmatpush1.bf16.msra.mxu0 %v415
        %422 = vmatprep.subr.bf16.mxu0 0
        %423 = vmatpush1.bf16.msra.mxu0 0
        %424 = vmatprep.subr.bf16.mxu0 0
        %425 = vmatpush1.bf16.msra.mxu0 0
        %426 = vmatprep.subr.bf16.mxu0 0
        %427 = vmatpush1.bf16.msra.mxu0 0
        %428 = vmatprep.subr.bf16.mxu0 0
        %429 = vmatpush1.bf16.msra.mxu0 0
        %430 = vmatprep.subr.bf16.mxu0 0
        %431 = vmatpush1.bf16.msra.mxu0 0
        %432 = vmatprep.subr.bf16.mxu0 0
        %433 = vmatpush1.bf16.msra.mxu0 0
        %434 = vmatprep.subr.bf16.mxu0 0
        %435 = vmatpush1.bf16.msra.mxu0 0
        %436 = vmatprep.subr.bf16.mxu0 0
        %437 = vmatpush1.bf16.msra.mxu0 0
        %438 = vmatprep.subr.bf16.mxu0 0
        %439 = vmatpush1.bf16.msra.mxu0 0
        %440 = vmatprep.subr.bf16.mxu0 0
        %441 = vmatpush1.bf16.msra.mxu0 0
        %442 = vmatprep.subr.bf16.mxu0 0
        %443 = vmatpush1.bf16.msra.mxu0 0
        %444 = vmatprep.subr.bf16.mxu0 0
        %445 = vmatpush1.bf16.msra.mxu0 0
        %446 = vmatprep.subr.bf16.mxu0 0
        %447 = vmatpush1.bf16.msra.mxu0 0
        %448 = vmatprep.subr.bf16.mxu0 0
        %449 = vmatpush1.bf16.msra.mxu0 0
        %450 = vmatprep.mubr.bf16.mxu0 0
        %451 = vmatmul.mubr.bf16.gmra.mrb[0].mxu0 %v359
        %v452 = vpop.f32.mrb[0].mxu0
        %v453 = vadd.f32 0.0, %v452
        %v454 = vpop.f32.mrb[0].mxu0
        %v455 = vpop.f32.mrb[0].mxu0
        %v456 = vpop.f32.mrb[0].mxu0
        %457 = vdwg.mxu0
        %v458 = vmul.f32 %v453, 14.285714
        %459 = vrot.lane.b32.xlu0 %v401, 2
        %v460 = vpop.permute.xlu0 %459
        %461 = vst [vmem:[%s326] sm:$0xff] %v460
        %462 = vrot.lane.b32.xlu0 %v401, 1
        %v463 = vpop.permute.xlu0 %462
        %464 = vst [vmem:[%s333] sm:$0xff] %v463
        %466 = vrot.lane.b32.xlu0 %v458, 2
        %v467 = vpop.permute.xlu0 %466
        %vm469 = vcmask 15360
        %470 = vst.msk [vmem:[%s326] sm:$0xff] %vm469, %v467
        %471 = vrot.lane.b32.xlu0 %v458, 1
        %v472 = vpop.permute.xlu0 %471
        %vm474 = vcmask 7168
        %475 = vst.msk [vmem:[%s333] sm:$0xff] %vm474, %v472
        %p476 = scmp.eq.s32.totalorder %s30, 0
        // Predicated region
        $region49: #{memory_moco_forward.1} parent=39 // pred_check
          %p477 = pneg %p476
        $region50: #{memory_moco_forward.1} parent=39 // pred_check_branch
          %479 = sbr.rel (%p477) target = $region52
        $region51: #{memory_moco_forward.1} parent=39 // pred_region
          %v480 = vld [vmem:[%s0] sm:$0xff]
          %481 = vst.msk [vmem:[%s326] sm:$0xff] %vm469, %v480
          %v482 = vld [vmem:[%s1] sm:$0xff]
          %483 = vst.msk [vmem:[%s333] sm:$0xff] %vm474, %v482
        $region52: #{memory_moco_forward.1} parent=39 // pred_fallthru
          _
        %s484 = sand.u32 %s163, 1
        %s485 = scalar_lea.sflag [#allocation4], %s484
        %s486 = sand.u32 %s163, 1
        %s487 = smul.addr %s486, 8
        %s488 = scalar_lea.vmem [#allocation7], %s487
        %s489 = sand.u32 %s189, 1
        %s490 = scalar_lea.sflag [#allocation9], %s489
        %s491 = sand.u32 %s189, 1
        %s492 = smul.addr %s491, 8
        %s493 = scalar_lea.vmem [#allocation8], %s492
        // Predicated region
        $region53: #{memory_moco_forward.1} parent=39 // pred_check
          %p494 = pneg %p173
        $region54: #{memory_moco_forward.1} parent=39 // pred_check_branch
          %496 = sbr.rel (%p494) target = $region56
        $region55: #{memory_moco_forward.1} parent=39 // pred_region
          %s498 = ssub.s32 128, 128
          %499 = vsyncadd %s485, %s498
          %s500 = smul.addr %s30, 128
          %s501 = scalar_lea.hbm %s5, %s500
          %s503 = sshll.u32 %s488, 4
          %s504 = int_to_ptr.vmem [resolvable:$true] %s503
          %506 = dma.vmem_to_hbm [thread:$0]  %s504, 128, %s501, %s485
        $region56: #{memory_moco_forward.1} parent=39 // pred_fallthru
          _
        // Predicated region
        $region57: #{memory_moco_forward.1} parent=39 // pred_check
          %p507 = pneg %p199
        $region58: #{memory_moco_forward.1} parent=39 // pred_check_branch
          %509 = sbr.rel (%p507) target = $region60
        $region59: #{memory_moco_forward.1} parent=39 // pred_region
          %s511 = ssub.s32 128, 128
          %512 = vsyncadd %s490, %s511
          %s513 = smul.addr %s30, 128
          %s514 = scalar_lea.hbm %s6, %s513
          %s516 = sshll.u32 %s493, 4
          %s517 = int_to_ptr.vmem [resolvable:$true] %s516
          %519 = dma.vmem_to_hbm [thread:$0]  %s517, 128, %s514, %s490
        $region60: #{memory_moco_forward.1} parent=39 // pred_fallthru
          _
      $region40: #{memory_moco_forward.1} parent=5 // pred_fallthru
        _
      %p520 = scmp.le.s32.totalorder 2, %s25
      // Predicated region
      $region61: #{memory_moco_forward.1} parent=5 // pred_check
        %p521 = pneg %p520
      $region62: #{memory_moco_forward.1} parent=5 // pred_check_branch
        %523 = sbr.rel (%p521) target = $region64
      $region63: #{memory_moco_forward.1} parent=5 // pred_region
        %s524 = ssub.s32 %s25, 2
        // Predicated region
        $region65: #{memory_moco_forward.1} parent=63 // pred_check
          %p525 = pneg %p179
        $region66: #{memory_moco_forward.1} parent=63 // pred_check_branch
          %527 = sbr.rel (%p525) target = $region68
        $region67: #{memory_moco_forward.1} parent=63 // pred_region
          %s528 = sand.u32 %s164, 1
          %s529 = scalar_lea.sflag [#allocation4], %s528
          %s530 = sand.u32 %s164, 1
          %s531 = smul.addr %s530, 8
          %s532 = scalar_lea.vmem [#allocation7], %s531
          %533 = dma.done %s529, 128
        $region68: #{memory_moco_forward.1} parent=63 // pred_fallthru
          _
        // Predicated region
        $region69: #{memory_moco_forward.1} parent=63 // pred_check
          %p534 = pneg %p205
        $region70: #{memory_moco_forward.1} parent=63 // pred_check_branch
          %536 = sbr.rel (%p534) target = $region72
        $region71: #{memory_moco_forward.1} parent=63 // pred_region
          %s537 = sand.u32 %s190, 1
          %s538 = scalar_lea.sflag [#allocation9], %s537
          %s539 = sand.u32 %s190, 1
          %s540 = smul.addr %s539, 8
          %s541 = scalar_lea.vmem [#allocation8], %s540
          %542 = dma.done %s538, 128
        $region72: #{memory_moco_forward.1} parent=63 // pred_fallthru
          _
      $region64: #{memory_moco_forward.1} parent=5 // pred_fallthru
        _
    $region6: #{memory_moco_forward.1} parent=1 // loop_footer
      %s29 = sadd.s32 1, %s25
    $region7: #{memory_moco_forward.1} parent=1 // loop_footer_branch
      %24 = sbr.rel target = $region3
    $region8: #{memory_moco_forward.1} parent=1 // loop_exit
      _
    %543 = vsyncpa [#allocation3], 1
    %s544 = scalar_lea.sflag [#allocation3], 1
    %545 = vsyncpa %s544, 1
    %546 = vsyncpa [#allocation6], 1
    %s547 = scalar_lea.sflag [#allocation6], 1
    %548 = vsyncpa %s547, 1
    %549 = vsyncpa [#allocation4], 1
    %s550 = scalar_lea.sflag [#allocation4], 1
    %551 = vsyncpa %s550, 1
    %552 = vsyncpa [#allocation9], 1
    %s553 = scalar_lea.sflag [#allocation9], 1
    %554 = vsyncpa %s553, 1

</llo_original>
